<compile_context>
chip_gen: v7x
topology: tpu7x:2x2x1
jax: 0.10.0
libtpu: 0.0.40
codegen_flags: <defaults>
</compile_context>

<pallas_src>
import functools

import numpy as np
import jax
import jax.numpy as jnp
from jax.experimental import pallas as pl
from jax.experimental.pallas import tpu as pltpu

EPS = 1e-12       # F.normalize eps
_LANE = 128       # TPU lane width
_SUBLANE = 8      # f32 sublane tile


def _round_up(v, m):
    return (v + m - 1) // m * m


def _pick_sample_block(nb_samples, bp, max_rows=512):
    """Largest divisor Sb of nb_samples with Sb * Bp <= max_rows (>= 1)."""
    sb = 1
    for cand in range(1, nb_samples + 1):
        if nb_samples % cand == 0 and cand * bp <= max_rows:
            sb = cand
    return sb


def _mc_cosine_kernel(seed_ref, xrep_ref, wt_ref, out_ref, *, rows, d, thresh_q24):
    """One grid step == one block of `Sb` MC-dropout samples.

    seed_ref: (1,)        int32 SMEM  base PRNG seed (scalar prefetch)
    xrep_ref: (rows, D)   f32         features replicated Sb times (grid-invariant)
    wt_ref:   (D, Cp)     bf16        pre-normalized, transposed, padded W
    out_ref:  (rows, Cp)  f32         cosine sims for this sample block
    """
    # ---- stateless counter-based dropout mask (portable: no pltpu PRNG) ----
    row_ids = jax.lax.broadcasted_iota(jnp.int32, (rows, d), 0)
    col_ids = jax.lax.broadcasted_iota(jnp.int32, (rows, d), 1)
    ctr = (pl.program_id(0) * jnp.int32(rows) + row_ids) * jnp.int32(d) + col_ids
    ctr = ctr ^ (seed_ref[0] * jnp.int32(-1640531527))   # golden-ratio seed mix

    # murmur3 fmix32 (uint32 modular arithmetic)
    h = ctr.astype(jnp.uint32)
    h = h ^ (h >> 16)
    h = h * jnp.uint32(0x85EBCA6B)
    h = h ^ (h >> 13)
    h = h * jnp.uint32(0xC2B2AE35)
    h = h ^ (h >> 16)
    h24 = jnp.bitwise_and(h, jnp.uint32(0x00FFFFFF)).astype(jnp.int32)  # [0, 2^24)
    keep = h24 >= jnp.int32(thresh_q24)                  # drop with probability p

    # NOTE: the 1/(1-p) inverted-dropout scale is a uniform row scale and
    # cancels under the L2 normalization below, so it is intentionally omitted.
    xd = jnp.where(keep, xrep_ref[...], jnp.float32(0.0))

    # ---- row L2-normalize (f32, rsqrt on the EUP) ---------------------------
    ssq = jnp.sum(xd * xd, axis=-1, keepdims=True)
    xn = xd * jax.lax.rsqrt(jnp.maximum(ssq, jnp.float32(EPS * EPS)))

    # ---- single MXU matmul for the whole block: (Sb*Bp, D) @ (D, Cp) --------
    out_ref[...] = jnp.dot(xn.astype(jnp.bfloat16), wt_ref[...],
                           preferred_element_type=jnp.float32)


def mc_cosine_sampled_similarities(x, weights, *, dropout_p, nb_samples, seed):
    """Per-MC-sample cosine similarities. Returns (S, B, C) float32."""
    b, d = x.shape
    c = weights.shape[0]
    s = int(nb_samples)

    bp = _round_up(b, _SUBLANE)     # sublane-aligned batch
    cp = _round_up(c, _LANE)        # lane-dense class dim (fills MXU N)

    # Hoisted out of the grid: normalize W once, pad classes to Cp with zero
    # rows, pre-transpose to (D, Cp), cast to bf16 for the MXU.
    w32 = weights.astype(jnp.float32)
    wn = w32 / jnp.maximum(
        jnp.sqrt(jnp.sum(w32 * w32, axis=-1, keepdims=True)), EPS)
    wt = jnp.zeros((cp, d), jnp.float32).at[:c].set(wn).T.astype(jnp.bfloat16)

    # Pad batch rows with zeros (zero rows -> zero sims, sliced off below).
    x_p = jnp.zeros((bp, d), jnp.float32).at[:b].set(x.astype(jnp.float32))

    # Sample-block size: keep Sb*Bp rows per step modest so the (double
    # buffered) blocks fit comfortably even in v7x's 64 MiB VMEM.
    sb = _pick_sample_block(s, bp)
    rows = sb * bp
    # Replicate features once in the wrapper (tiny, grid-invariant block).
    x_rep = jnp.tile(x_p, (sb, 1))                       # (rows, d)

    thresh_q24 = int(round(float(dropout_p) * (1 << 24)))
    seed_arr = jnp.asarray([seed], dtype=jnp.int32)
    kernel = functools.partial(
        _mc_cosine_kernel, rows=rows, d=d, thresh_q24=thresh_q24)

    out_flat = pl.pallas_call(
        kernel,
        out_shape=jax.ShapeDtypeStruct((s * bp, cp), jnp.float32),
        grid_spec=pltpu.PrefetchScalarGridSpec(
            num_scalar_prefetch=1,
            grid=(s // sb,),
            in_specs=[
                pl.BlockSpec((rows, d), lambda i, seed_ref: (0, 0)),  # x replicated (invariant)
                pl.BlockSpec((d, cp), lambda i, seed_ref: (0, 0)),    # Wn^T (invariant)
            ],
            out_specs=pl.BlockSpec((rows, cp), lambda i, seed_ref: (i, 0)),
        ),
        compiler_params=pltpu.CompilerParams(
            dimension_semantics=("parallel",)),   # shard sample blocks over TCs
    )(seed_arr, x_rep, wt)

    # (S*Bp, Cp) -> (S, B, C): drop batch / class padding.
    return out_flat.reshape(s, bp, cp)[:, :b, :c]


def var_ratio(sampled_similarities, nb_samples):
    """sampled_similarities: (B, S, C). Vectorized, on-device.

    Matches the reference per-row np.histogram(range=(0, 10)) exactly when
    C == 10; generalized to C bins for other class counts.
    """
    pred = jnp.argmax(sampled_similarities, axis=2)                      # (B, S)
    counts = jax.nn.one_hot(pred, sampled_similarities.shape[2],
                            dtype=jnp.float32).sum(axis=1)               # (B, C)
    return 1.0 - counts.max(axis=1) / nb_samples


def mc_cosine_classifier_forward(x, weights, *, dropout_p, nb_samples, seed=0):
    """Eval-mode MCCosineClassifier.forward (distance='cosine', 1 proxy/class)."""
    sims = mc_cosine_sampled_similarities(
        x, weights, dropout_p=dropout_p, nb_samples=nb_samples, seed=seed)  # (S,B,C)
    sampled = jnp.transpose(sims, (1, 0, 2))      # (B, S, C) like the torch buffer
    logits = jnp.mean(sampled, axis=1)            # (B, C)
    return {"logits": logits, "var_ratio": var_ratio(sampled, nb_samples)}


if __name__ == "__main__":
    B, D, C = 2, 32, 10            # batch, features_dim, n_classes
    NB_SAMPLES, DROPOUT = 10, 0.2

    key = jax.random.PRNGKey(0)
    kx, kw = jax.random.split(key)
    x = jax.random.normal(kx, (B, D), dtype=jnp.float32)
    # add_classes: kaiming_normal_(nonlinearity='linear') -> std = 1/sqrt(fan_in=D)
    weights = jax.random.normal(kw, (C, D), dtype=jnp.float32) / np.sqrt(D).astype(np.float32)

    # Self-check: with dropout p=0 every MC sample must equal the plain cosine
    # classifier (up to bf16 matmul inputs).
    sims_p0 = mc_cosine_sampled_similarities(
        x, weights, dropout_p=0.0, nb_samples=2, seed=123)
    xn_ref = x / jnp.maximum(jnp.linalg.norm(x, axis=-1, keepdims=True), EPS)
    wn_ref = weights / jnp.maximum(jnp.linalg.norm(weights, axis=-1, keepdims=True), EPS)
    ref = xn_ref @ wn_ref.T
    np.testing.assert_allclose(np.asarray(sims_p0[0]), np.asarray(ref), atol=2e-2)
    np.testing.assert_allclose(np.asarray(sims_p0[1]), np.asarray(ref), atol=2e-2)

    out = mc_cosine_classifier_forward(
        x, weights, dropout_p=DROPOUT, nb_samples=NB_SAMPLES, seed=0)
    logits = jax.block_until_ready(out["logits"])
    vr = jax.block_until_ready(out["var_ratio"])
    assert logits.shape == (B, C)
    assert vr.shape == (B,)
    assert bool(jnp.all(jnp.isfinite(logits)))
    assert bool(jnp.all(jnp.abs(logits) <= 1.05))   # cosine sims (bf16 slack)
    print("KERNEL_OK")
</pallas_src>

<mosaic_0001>
module attributes {stable_mosaic.version = 11 : i64} {
  func.func @_mc_cosine_kernel(%arg0: i32, %arg1: memref<1xi32, #tpu.memory_space<smem>>, %arg2: memref<16x32xf32, #tpu.memory_space<vmem>>, %arg3: memref<32x128xbf16, #tpu.memory_space<vmem>>, %arg4: memref<16x128xf32, #tpu.memory_space<vmem>>) attributes {dimension_semantics = [#tpu.dimension_semantics<parallel>], iteration_bounds = array<i64: 1>, scalar_prefetch = 1 : i64, scratch_operands = 0 : i64, tpu.core_type = #tpu.core_type<tc>, window_params = [{pipeline_mode = #tpu.pipeline_mode<synchronous>, transform_indices = @transform_0, window_bounds = array<i64: 16, 32>}, {pipeline_mode = #tpu.pipeline_mode<synchronous>, transform_indices = @transform_1, window_bounds = array<i64: 32, 128>}, {transform_indices = @transform_2, window_bounds = array<i64: 16, 128>}]} {
    %0 = tpu.iota {dimensions = array<i32: 0>} : vector<16x32xi32>
    %1 = tpu.iota {dimensions = array<i32: 1>} : vector<16x32xi32>
    %c16_i32 = arith.constant 16 : i32
    %2 = arith.muli %arg0, %c16_i32 : i32
    %3 = vector.broadcast %2 : i32 to vector<16x32xi32>
    %4 = arith.addi %3, %0 : vector<16x32xi32>
    %c32_i32 = arith.constant 32 : i32
    %5 = vector.broadcast %c32_i32 : i32 to vector<16x32xi32>
    %6 = arith.muli %4, %5 : vector<16x32xi32>
    %7 = arith.addi %6, %1 : vector<16x32xi32>
    %c0 = arith.constant 0 : index
    %8 = memref.load %arg1[%c0] : memref<1xi32, #tpu.memory_space<smem>>
    %c-1640531527_i32 = arith.constant -1640531527 : i32
    %9 = arith.muli %8, %c-1640531527_i32 : i32
    %10 = vector.broadcast %9 : i32 to vector<16x32xi32>
    %11 = arith.xori %7, %10 : vector<16x32xi32>
    %c16_i32_0 = arith.constant 16 : i32
    %12 = vector.broadcast %c16_i32_0 : i32 to vector<16x32xi32>
    %13 = arith.shrui %11, %12 : vector<16x32xi32>
    %14 = arith.xori %11, %13 : vector<16x32xi32>
    %c-2048144789_i32 = arith.constant -2048144789 : i32
    %15 = vector.broadcast %c-2048144789_i32 : i32 to vector<16x32xi32>
    %16 = arith.muli %14, %15 : vector<16x32xi32>
    %c13_i32 = arith.constant 13 : i32
    %17 = vector.broadcast %c13_i32 : i32 to vector<16x32xi32>
    %18 = arith.shrui %16, %17 : vector<16x32xi32>
    %19 = arith.xori %16, %18 : vector<16x32xi32>
    %c-1028477387_i32 = arith.constant -1028477387 : i32
    %20 = vector.broadcast %c-1028477387_i32 : i32 to vector<16x32xi32>
    %21 = arith.muli %19, %20 : vector<16x32xi32>
    %c16_i32_1 = arith.constant 16 : i32
    %22 = vector.broadcast %c16_i32_1 : i32 to vector<16x32xi32>
    %23 = arith.shrui %21, %22 : vector<16x32xi32>
    %24 = arith.xori %21, %23 : vector<16x32xi32>
    %c16777215_i32 = arith.constant 16777215 : i32
    %25 = vector.broadcast %c16777215_i32 : i32 to vector<16x32xi32>
    %26 = arith.andi %24, %25 : vector<16x32xi32>
    %c0_i32 = arith.constant 0 : i32
    %27 = vector.broadcast %c0_i32 : i32 to vector<16x32xi32>
    %28 = arith.cmpi sge, %26, %27 : vector<16x32xi32>
    %c0_2 = arith.constant 0 : index
    %c0_3 = arith.constant 0 : index
    %29 = vector.load %arg2[%c0_2, %c0_3] : memref<16x32xf32, #tpu.memory_space<vmem>>, vector<16x32xf32>
    %cst = arith.constant 0.000000e+00 : f32
    %30 = vector.broadcast %cst : f32 to vector<16x32xf32>
    %31 = arith.select %28, %29, %30 : vector<16x32xi1>, vector<16x32xf32>
    %32 = arith.mulf %31, %31 : vector<16x32xf32>
    %cst_4 = arith.constant dense<0.000000e+00> : vector<16xf32>
    %33 = vector.multi_reduction <add>, %32, %cst_4 [1] : vector<16x32xf32> to vector<16xf32>
    %34 = vector.shape_cast %33 : vector<16xf32> to vector<16x1xf32>
    %cst_5 = arith.constant 1.000000e-24 : f32
    %35 = vector.broadcast %cst_5 : f32 to vector<16x1xf32>
    %36 = arith.maximumf %34, %35 : vector<16x1xf32>
    %37 = math.rsqrt %36 : vector<16x1xf32>
    %38 = vector.broadcast %37 : vector<16x1xf32> to vector<16x32xf32>
    %39 = arith.mulf %31, %38 : vector<16x32xf32>
    %40 = arith.truncf %39 : vector<16x32xf32> to vector<16x32xbf16>
    %c0_6 = arith.constant 0 : index
    %c0_7 = arith.constant 0 : index
    %41 = vector.load %arg3[%c0_6, %c0_7] : memref<32x128xbf16, #tpu.memory_space<vmem>>, vector<32x128xbf16>
    %cst_8 = arith.constant dense<0.000000e+00> : vector<16x128xf32>
    %42 = tpu.matmul %40, %41, %cst_8 {dimension_numbers = #tpu.dot_dimension_numbers<[1], [0], [0], [1], [0, 0, 1, 1], [], []>} : vector<16x32xbf16>, vector<32x128xbf16>, vector<16x128xf32> -> vector<16x128xf32>
    %c0_9 = arith.constant 0 : index
    %c0_10 = arith.constant 0 : index
    %43 = vector.load %arg4[%c0_9, %c0_10] : memref<16x128xf32, #tpu.memory_space<vmem>>, vector<16x128xf32>
    tpu.vector_store %arg4[%c0_9, %c0_10], %42 {strides = array<i32>} : memref<16x128xf32, #tpu.memory_space<vmem>>, vector<16x128xf32>,
    return
  }
  func.func @transform_0(%arg0: i32, %arg1: memref<1xi32, #tpu.memory_space<smem>>) -> (i32, i32) {
    %c0_i32 = arith.constant 0 : i32
    %c0_i32_0 = arith.constant 0 : i32
    %c0_i32_1 = arith.constant 0 : i32
    return %c0_i32, %c0_i32_0 : i32, i32
  }
  func.func @transform_1(%arg0: i32, %arg1: memref<1xi32, #tpu.memory_space<smem>>) -> (i32, i32) {
    %c0_i32 = arith.constant 0 : i32
    %c0_i32_0 = arith.constant 0 : i32
    %c0_i32_1 = arith.constant 0 : i32
    return %c0_i32, %c0_i32_0 : i32, i32
  }
  func.func @transform_2(%arg0: i32, %arg1: memref<1xi32, #tpu.memory_space<smem>>) -> (i32, i32) {
    %c0_i32 = arith.constant 0 : i32
    %c0_i32_0 = arith.constant 0 : i32
    return %arg0, %c0_i32 : i32, i32
  }
}

</mosaic_0001>

<llo_original>
// kernel: tpu_custom_call.1
$region0: #{tpu_custom_call.1}
  #allocation0 [shape = 'u32[]', space=smem, size = 0x4, offset = 0x4, fixed_abs, tag = 'smem constant byte address 0x4 - core index']
  #allocation1 [shape = 'u32[144,128]{1,0:T(1,128)}', space=vmem, size = 0x12000, scoped, tag = 'internal scratch']
  #allocation2 [shape = 's32[1]{0}', space=sflag, size = 0x4, scoped, tag = 'scoped memory for tpu_custom_call.1']
  #allocation3 [shape = 's32[1]{0:T(128)S(6)}', space=smem, size = 0x200, scoped, tag = 'prefetched SMEM operand 0']
  %s0 = inlined_call_operand.<no memory space> [shape: s32[1], index: 0, kind: input, shape index: {}]
  %s1 = inlined_call_operand.hbm [shape: f32[16,32], index: 1, kind: input, shape index: {}]
  %s2 = inlined_call_operand.hbm [shape: bf16[32,128], index: 2, kind: input, shape index: {}]
  %s3 = inlined_call_operand.hbm [shape: f32[16,128], index: 3, kind: output, shape index: {}]
  %s4 = sld [smem:[#allocation0]]
  $region26: #{tpu_custom_call.1} parent=0
    _
  %s6 = ssub.s32 1, %s4
  %s7 = scalar_select 0, %s6, %s4
  %8 = sst [smem:[#allocation3]] %s0
  $region1: #{tpu_custom_call.1} parent=0
    #allocation4 [shape = 'u8[8192]{0}', space=vmem, size = 0x2000, scoped, tag = 'input window, operand 1, single buffered']
    #allocation5 [shape = 's32[1]{0}', space=sflag, size = 0x4, scoped, tag = 'scoped memory for tpu_custom_call.1']
    #allocation6 [shape = 's32[1]{0}', space=sflag, size = 0x4, scoped, tag = 'scoped memory for tpu_custom_call.1']
    #allocation7 [shape = 'u8[8192]{0}', space=vmem, size = 0x2000, scoped, tag = 'input window, operand 2, single buffered']
    #allocation8 [shape = 's32[1]{0}', space=sflag, size = 0x4, scoped, tag = 'scoped memory for tpu_custom_call.1']
    #allocation9 [shape = 'u8[8192]{0}', space=vmem, size = 0x2000, scoped, tag = 'output window, operand 0, single buffered']
    %9 = vsyncpa [#allocation5], 0
    %10 = vsyncpa [#allocation8], 0
    %11 = vsyncpa [#allocation6], 0
    // Predicated region
    $region2: #{tpu_custom_call.1} parent=1 // pred_check
      _
    $region3: #{tpu_custom_call.1} parent=1 // pred_check_branch
      %13 = sbr.rel (0) target = $region5
    $region4: #{tpu_custom_call.1} parent=1 // pred_region
      %s15 = ssub.s32 256, 256
      %16 = vsyncadd [#allocation5], %s15
      %s17 = sshll.u32 [#allocation4], 4
      %s18 = int_to_ptr.vmem [resolvable:$true] %s17
      %23 = dma.hbm_to_vmem [thread:$0]  %s1, 256, %s18, [#allocation5], 128, 128, 8
    $region5: #{tpu_custom_call.1} parent=1 // pred_fallthru
      _
    // Predicated region
    $region6: #{tpu_custom_call.1} parent=1 // pred_check
      _
    $region7: #{tpu_custom_call.1} parent=1 // pred_check_branch
      %25 = sbr.rel (0) target = $region9
    $region8: #{tpu_custom_call.1} parent=1 // pred_region
      %s27 = ssub.s32 256, 256
      %28 = vsyncadd [#allocation8], %s27
      %s29 = sshll.u32 [#allocation7], 4
      %s30 = int_to_ptr.vmem [resolvable:$true] %s29
      %35 = dma.hbm_to_vmem [thread:$0]  %s2, 256, %s30, [#allocation8], 64, 64, 4
    $region9: #{tpu_custom_call.1} parent=1 // pred_fallthru
      _
    // Predicated region
    $region10: #{tpu_custom_call.1} parent=1 // pred_check
      _
    $region11: #{tpu_custom_call.1} parent=1 // pred_check_branch
      %37 = sbr.rel (0) target = $region13
    $region12: #{tpu_custom_call.1} parent=1 // pred_region
      %38 = dma.done [#allocation5], 256
    $region13: #{tpu_custom_call.1} parent=1 // pred_fallthru
      _
    // Predicated region
    $region14: #{tpu_custom_call.1} parent=1 // pred_check
      _
    $region15: #{tpu_custom_call.1} parent=1 // pred_check_branch
      %40 = sbr.rel (0) target = $region17
    $region16: #{tpu_custom_call.1} parent=1 // pred_region
      %41 = dma.done [#allocation8], 256
    $region17: #{tpu_custom_call.1} parent=1 // pred_fallthru
      _
    %v43 = vlaneseq
    %v44 = vshrl.u32 %v43, 7
    %v45 = vadd.s32 %v44, 8
    %v46 = vlaneseq
    %v47 = vand.u32 %v46, 127
    %s48 = smul.u32 0, 16
    %v49 = vstv %s48
    %v50 = vadd.s32 %v49, %v44
    %v51 = vadd.s32 %v49, %v45
    %v52 = vmul.u32 %v50, 32
    %v53 = vmul.u32 %v51, 32
    %v54 = vadd.s32 %v52, %v47
    %v55 = vadd.s32 %v53, %v47
    %s56 = sld [smem:[#allocation3]]
    %s57 = smul.u32 %s56, 2654435769
    %v58 = vstv %s57
    %v59 = vxor.u32 %v54, %v58
    %v60 = vxor.u32 %v55, %v58
    %v61 = vshrl.u32 %v59, 16
    %v62 = vshrl.u32 %v60, 16
    %v63 = vxor.u32 %v59, %v61
    %v64 = vxor.u32 %v60, %v62
    %v65 = vmul.u32 %v63, 2246822507
    %v66 = vmul.u32 %v64, 2246822507
    %v67 = vshrl.u32 %v65, 13
    %v68 = vshrl.u32 %v66, 13
    %v69 = vxor.u32 %v65, %v67
    %v70 = vxor.u32 %v66, %v68
    %v71 = vmul.u32 %v69, 3266489909
    %v72 = vmul.u32 %v70, 3266489909
    %v73 = vshrl.u32 %v71, 16
    %v74 = vshrl.u32 %v72, 16
    %v75 = vxor.u32 %v71, %v73
    %v76 = vxor.u32 %v72, %v74
    %v77 = vand.u32 %v75, 16777215
    %v78 = vand.u32 %v76, 16777215
    %vm79 = vcmp.ge.s32.totalorder %v77, 0
    %vm80 = vcmp.ge.s32.totalorder %v78, 0
    %v81 = vld [vmem:[#allocation4] sm:$0xff]
    %v82 = vld [vmem:[#allocation4 + $0x8] sm:$0xff]
    %v83 = vsel %vm79, %v81, 0.0
    %v84 = vsel %vm80, %v82, 0.0
    %v85 = vmul.f32 %v83, %v83
    %v86 = vmul.f32 %v84, %v84
    %vm87 = vcmask 261120
    %v88 = vsel %vm87, %v85, 0.0
    %89 = vadd.xlane.f32.xlu0 %v88
    %v90 = vpop.xlane.xlu0 %89
    %v91 = vsel %vm87, %v86, 0.0
    %92 = vadd.xlane.f32.xlu0 %v91
    %v93 = vpop.xlane.xlu0 %92
    %v94 = vmax.f32 %v90, 1e-24
    %v95 = vmax.f32 %v93, 1e-24
    %v96 = vrsqrt.pop %v94
    %v97 = vrsqrt.pop %v95
    %v98 = vmul.f32 %v83, %v96
    %v99 = vmul.f32 %v84, %v97
    %v100 = vpack.c.bf16 %v99, %v98
    %v101 = vld [vmem:[#allocation7] sm:$0xf]
    %v102 = vld [vmem:[#allocation7 + $0x4] sm:$0xf]
    %v103 = vld [vmem:[#allocation7 + $0x8] sm:$0xf]
    %v104 = vld [vmem:[#allocation7 + $0xc] sm:$0xf]
    %v109 = vunpack.c.l.b16 %v101
    %v110 = vunpack.c.l.b16 %v102
    %v111 = vunpack.c.l.b16 %v103
    %v112 = vunpack.c.l.b16 %v104
    %v113 = vpack.c.b16 %v110, %v109
    %v114 = vpack.c.b16 %v112, %v111
    %v118 = vsel %vm87, %v100, 0
    %120 = vmatprep.subr.bf16.mxu0 0
    %121 = vmatpush1.bf16.msra.mxu0 %v113
    %122 = vmatprep.subr.bf16.mxu0 0
    %123 = vmatpush1.bf16.msra.mxu0 %v114
    %124 = vmatprep.subr.bf16.mxu0 0
    %125 = vmatpush1.bf16.msra.mxu0 0
    %126 = vmatprep.subr.bf16.mxu0 0
    %127 = vmatpush1.bf16.msra.mxu0 0
    %128 = vmatprep.subr.bf16.mxu0 0
    %129 = vmatpush1.bf16.msra.mxu0 0
    %130 = vmatprep.subr.bf16.mxu0 0
    %131 = vmatpush1.bf16.msra.mxu0 0
    %132 = vmatprep.subr.bf16.mxu0 0
    %133 = vmatpush1.bf16.msra.mxu0 0
    %134 = vmatprep.subr.bf16.mxu0 0
    %135 = vmatpush1.bf16.msra.mxu0 0
    %136 = vmatprep.subr.bf16.mxu0 0
    %137 = vmatpush1.bf16.msra.mxu0 0
    %138 = vmatprep.subr.bf16.mxu0 0
    %139 = vmatpush1.bf16.msra.mxu0 0
    %140 = vmatprep.subr.bf16.mxu0 0
    %141 = vmatpush1.bf16.msra.mxu0 0
    %142 = vmatprep.subr.bf16.mxu0 0
    %143 = vmatpush1.bf16.msra.mxu0 0
    %144 = vmatprep.subr.bf16.mxu0 0
    %145 = vmatpush1.bf16.msra.mxu0 0
    %146 = vmatprep.subr.bf16.mxu0 0
    %147 = vmatpush1.bf16.msra.mxu0 0
    %148 = vmatprep.subr.bf16.mxu0 0
    %149 = vmatpush1.bf16.msra.mxu0 0
    %150 = vmatprep.subr.bf16.mxu0 0
    %151 = vmatpush1.bf16.msra.mxu0 0
    %152 = vmatprep.mubr.bf16.mxu0 0
    %153 = vmatmul.mubr.bf16.gmra.mrb[0].mxu0 %v118
    %v154 = vpop.f32.mrb[0].mxu0
    %v155 = vadd.f32 0.0, %v154
    %v156 = vpop.f32.mrb[0].mxu0
    %v157 = vpop.f32.mrb[0].mxu0
    %v158 = vadd.f32 0.0, %v157
    %v159 = vpop.f32.mrb[0].mxu0
    %160 = vdwg.mxu0
    %161 = vst [vmem:[#allocation9] sm:$0xff] %v155
    %162 = vst [vmem:[#allocation9 + $0x8] sm:$0xff] %v158
    // Predicated region
    $region18: #{tpu_custom_call.1} parent=1 // pred_check
      _
    $region19: #{tpu_custom_call.1} parent=1 // pred_check_branch
      %164 = sbr.rel (0) target = $region21
    $region20: #{tpu_custom_call.1} parent=1 // pred_region
      %s166 = ssub.s32 256, 256
      %167 = vsyncadd [#allocation6], %s166
      %s168 = sshll.u32 [#allocation9], 4
      %s169 = int_to_ptr.vmem [resolvable:$true] %s168
      %174 = dma.vmem_to_hbm [thread:$0]  %s169, 256, %s3, [#allocation6], 128, 128, 8
    $region21: #{tpu_custom_call.1} parent=1 // pred_fallthru
      _
    // Predicated region
    $region22: #{tpu_custom_call.1} parent=1 // pred_check
      _
    $region23: #{tpu_custom_call.1} parent=1 // pred_check_branch
      %176 = sbr.rel (0) target = $region25
    $region24: #{tpu_custom_call.1} parent=1 // pred_region
      %177 = dma.done [#allocation6], 256
    $region25: #{tpu_custom_call.1} parent=1 // pred_fallthru
      _
    %178 = vsyncpa [#allocation5], 1
    %179 = vsyncpa [#allocation8], 1
    %180 = vsyncpa [#allocation6], 1

</llo_original>
